<compile_context>
chip_gen: v6e
topology: v6e:2x2x1
jax: 0.10.0
libtpu: 0.0.40
codegen_flags: <defaults>
</compile_context>

<pallas_src>
import jax
import jax.numpy as jnp
from jax.experimental import pallas as pl
from jax.experimental.pallas import tpu as pltpu


def _round_up(v, mult):
    return ((v + mult - 1) // mult) * mult


def _ranknet_kernel(x_ref, w1_ref, b1_ref, w2_ref, b2_ref, w3_ref, b3_ref,
                    o_ref):
    """One batch tile of the full 3-layer MLP.

    x_ref : (tile_m, d0)   compute dtype (bf16 or f32)
    w1_ref: (d0, d1)       compute dtype, pre-transposed [in, out]
    b1_ref: (1, d1)        f32
    w2_ref: (d2, d1)       compute dtype, PyTorch [out, in] layout
    b2_ref: (d2, 1)        f32
    w3_ref: (d2, 1)        f32 (final -> 1 layer, as a column)
    b3_ref: (1, 1)         f32
    o_ref : (1, 1, tile_m) f32 lane-dense row of scores
    """
    x = x_ref[...]                                               # (tile_m, d0)

    # fc1 + ReLU in natural [batch, features] layout: the MXU contracts x's
    # minor dim against W1t's major dim, so the big streamed x block never
    # goes through an XLU transpose.
    h = jnp.dot(x, w1_ref[...],
                preferred_element_type=jnp.float32)              # (tile_m, d1)
    h = jnp.maximum(h + b1_ref[...], 0.0)                        # F.relu, f32

    # fc2 + ReLU, switching to transposed [features, batch] layout so the
    # scores come out lane-dense.  Only the small (tile_m, d1) h1 block is
    # involved in the layout switch; activations are re-quantized to the
    # streaming dtype for the MXU while accumulation stays f32.
    h = jnp.einsum("od,md->om", w2_ref[...], h.astype(w2_ref.dtype),
                   preferred_element_type=jnp.float32)           # (d2, tile_m)
    h = jnp.maximum(h + b2_ref[...], 0.0)                        # F.relu, f32

    # fc3 (-> 1 score): VPU broadcast-multiply + sublane reduce (keeps the
    # N=1 matmul off the MXU), producing a lane-dense (1, tile_m) score row.
    y = jnp.sum(w3_ref[...] * h, axis=0, keepdims=True)          # (1, tile_m)
    y = jnp.clip(y + b3_ref[...], 0.0, 6.0)                      # nn.ReLU6
    o_ref[...] = y[None].astype(o_ref.dtype)                     # (1, 1, tile_m)


def ranknet_forward(x, params, *, tile_m=4096, compute_dtype=jnp.bfloat16):
    """RankNet forward.

    x: [batch, net_structures[0]].
    params: list of (W, b) in PyTorch nn.Linear layout (W: [out, in], b: [out])
            for the hidden layers plus the final (-> 1) scoring layer.
    compute_dtype: streaming/matmul dtype for x and the hidden-layer weights.
            bf16 halves HBM traffic on this memory-bound kernel; accumulation,
            bias/ReLU math and the returned scores stay float32.  For the full
            bandwidth win pass `x` already as bf16 so the wrapper cast is free.
    Returns scores of shape [batch, 1], float32.
    """
    (w1, b1), (w2, b2), (w3, b3) = params
    m, d0 = x.shape
    assert tile_m % 128 == 0, "tile_m must be a multiple of 128 (lane width)"

    # Tile selection: largest tile that (a) does not exceed the 128-padded
    # batch and (b) still leaves >= 2 grid steps when the batch spans more
    # than one 128-row block (keeps both v7x TensorCores busy via the
    # "parallel" grid axis).
    rows = _round_up(max(m, 1), 128)
    tile_m = min(tile_m, rows)
    if tile_m == rows and rows >= 2 * 128:
        tile_m = _round_up(rows // 2, 128)
    num_tiles = int(pl.cdiv(rows, tile_m))
    m_pad = num_tiles * tile_m
    if m_pad != m:
        x = jnp.pad(x, ((0, m_pad - m), (0, 0)))

    # Kernel-side layouts / dtypes.
    x = x.astype(compute_dtype)
    w1t = jnp.transpose(w1).astype(compute_dtype)      # (d0, d1) [in, out]
    w2c = w2.astype(compute_dtype)                      # (d2, d1) [out, in]
    b1r = b1.reshape(1, -1).astype(jnp.float32)         # (1, d1)
    b2c = b2.reshape(-1, 1).astype(jnp.float32)         # (d2, 1)
    w3c = w3.reshape(-1, 1).astype(jnp.float32)         # (d2, 1)
    b3s = b3.reshape(1, 1).astype(jnp.float32)          # (1, 1)
    d1 = w1t.shape[1]
    d2 = w2c.shape[0]

    def build(x_pipeline_mode):
        x_kwargs = ({"pipeline_mode": x_pipeline_mode}
                    if x_pipeline_mode is not None else {})
        return pl.pallas_call(
            _ranknet_kernel,
            out_shape=jax.ShapeDtypeStruct((num_tiles, 1, tile_m), jnp.float32),
            grid=(num_tiles,),
            in_specs=[
                pl.BlockSpec((tile_m, d0), lambda i: (i, 0), **x_kwargs),
                pl.BlockSpec((d0, d1), lambda i: (0, 0)),   # weights / biases
                pl.BlockSpec((1, d1), lambda i: (0, 0)),    # stay resident in
                pl.BlockSpec((d2, d1), lambda i: (0, 0)),   # VMEM across all
                pl.BlockSpec((d2, 1), lambda i: (0, 0)),    # grid steps
                pl.BlockSpec((d2, 1), lambda i: (0, 0)),
                pl.BlockSpec((1, 1), lambda i: (0, 0)),
            ],
            out_specs=pl.BlockSpec((1, 1, tile_m), lambda i: (i, 0, 0)),
            compiler_params=pltpu.CompilerParams(
                dimension_semantics=("parallel",)),
        )

    args = (x, w1t, b1r, w2c, b2c, w3c, b3s)

    # Deeper buffering on the streamed x block: per-step compute is only a few
    # hundred cycles, so a 3rd input buffer keeps the DMA engine busy at
    # moderate tile sizes.  Falls back to default double-buffering if this
    # jax/libtpu combination does not support pl.Buffered here.
    if num_tiles >= 3:
        try:
            out = build(pl.Buffered(3))(*args)
        except Exception:
            out = build(None)(*args)
    else:
        out = build(None)(*args)

    # Lane-dense (num_tiles, 1, tile_m) scores -> (batch, 1), dropping padding.
    return out.reshape(-1)[:m].reshape(m, 1)


def init_ranknet_params(key, net_structures):
    """Deterministic synthetic init in PyTorch nn.Linear layout:
    W [out, in], b [out], for hidden layers plus the final -> 1 layer."""
    dims = list(net_structures) + [1]
    params = []
    for i in range(len(dims) - 1):
        key, kw, kb = jax.random.split(key, 3)
        fan_in, fan_out = dims[i], dims[i + 1]
        bound = 1.0 / jnp.sqrt(jnp.float32(fan_in))
        w = jax.random.uniform(kw, (fan_out, fan_in), jnp.float32, -bound, bound)
        b = jax.random.uniform(kb, (fan_out,), jnp.float32, -bound, bound)
        params.append((w, b))
    return params


def ranknet_reference(x, params):
    """Pure-JAX full-f32 reference matching the PyTorch forward."""
    h = x
    for w, b in params[:-1]:
        h = jnp.maximum(
            jnp.dot(h, w.T, precision=jax.lax.Precision.HIGHEST) + b, 0.0)
    w, b = params[-1]
    y = jnp.dot(h, w.T, precision=jax.lax.Precision.HIGHEST) + b
    return jnp.clip(y, 0.0, 6.0)


if __name__ == "__main__":
    net_structures = [32, 16, 8]   # fc1: 32->16, fc2: 16->8, fc3: 8->1
    batch = 385                    # deliberately ragged (not a multiple of 128)

    key = jax.random.PRNGKey(0)
    key, kx = jax.random.split(key)
    x = jax.random.normal(kx, (batch, net_structures[0]), jnp.float32)
    params = init_ranknet_params(key, net_structures)
    ref = ranknet_reference(x, params)

    # Run 1: small tiles to exercise a multi-step "parallel" grid, the ragged
    # padding path and the 3-deep input buffering.
    out = jax.block_until_ready(ranknet_forward(x, params, tile_m=128))
    assert out.shape == (batch, 1) and out.dtype == jnp.float32
    # bf16-streamed kernel vs full-f32 reference: quantization error is a few
    # 1e-3 at these unit-scale values; 2e-2 leaves ample margin.
    assert jnp.allclose(out, ref, atol=2e-2, rtol=2e-2), \
        f"max|diff|={float(jnp.max(jnp.abs(out - ref)))}"

    # Run 2: default (large) tile, which the wrapper splits into two tiles so
    # both v7x TensorCores would be used on this small batch.
    out2 = jax.block_until_ready(ranknet_forward(x, params))
    assert out2.shape == (batch, 1) and out2.dtype == jnp.float32
    assert jnp.allclose(out2, ref, atol=2e-2, rtol=2e-2), \
        f"max|diff|={float(jnp.max(jnp.abs(out2 - ref)))}"

    print("KERNEL_OK")
</pallas_src>

<mosaic_0001>
module attributes {stable_mosaic.version = 11 : i64} {
  func.func @_ranknet_kernel(%arg0: i32, %arg1: memref<128x32xbf16, #tpu.memory_space<vmem>>, %arg2: memref<32x16xbf16, #tpu.memory_space<vmem>>, %arg3: memref<1x16xf32, #tpu.memory_space<vmem>>, %arg4: memref<8x16xbf16, #tpu.memory_space<vmem>>, %arg5: memref<8x1xf32, #tpu.memory_space<vmem>>, %arg6: memref<8x1xf32, #tpu.memory_space<vmem>>, %arg7: memref<1x1xf32, #tpu.memory_space<vmem>>, %arg8: memref<1x1x128xf32, #tpu.memory_space<vmem>>) attributes {dimension_semantics = [#tpu.dimension_semantics<parallel>], iteration_bounds = array<i64: 4>, scalar_prefetch = 0 : i64, scratch_operands = 0 : i64, tpu.core_type = #tpu.core_type<tc>, window_params = [{transform_indices = @transform_0, window_bounds = array<i64: 128, 32>}, {pipeline_mode = #tpu.pipeline_mode<synchronous>, transform_indices = @transform_1, window_bounds = array<i64: 32, 16>}, {pipeline_mode = #tpu.pipeline_mode<synchronous>, transform_indices = @transform_2, window_bounds = array<i64: 1, 16>}, {pipeline_mode = #tpu.pipeline_mode<synchronous>, transform_indices = @transform_3, window_bounds = array<i64: 8, 16>}, {pipeline_mode = #tpu.pipeline_mode<synchronous>, transform_indices = @transform_4, window_bounds = array<i64: 8, 1>}, {pipeline_mode = #tpu.pipeline_mode<synchronous>, transform_indices = @transform_5, window_bounds = array<i64: 8, 1>}, {pipeline_mode = #tpu.pipeline_mode<synchronous>, transform_indices = @transform_6, window_bounds = array<i64: 1, 1>}, {transform_indices = @transform_7, window_bounds = array<i64: 1, 1, 128>}]} {
    %c0 = arith.constant 0 : index
    %c0_0 = arith.constant 0 : index
    %0 = vector.load %arg1[%c0, %c0_0] : memref<128x32xbf16, #tpu.memory_space<vmem>>, vector<128x32xbf16>
    %c0_1 = arith.constant 0 : index
    %c0_2 = arith.constant 0 : index
    %1 = vector.load %arg2[%c0_1, %c0_2] : memref<32x16xbf16, #tpu.memory_space<vmem>>, vector<32x16xbf16>
    %cst = arith.constant dense<0.000000e+00> : vector<128x16xf32>
    %2 = tpu.matmul %0, %1, %cst {dimension_numbers = #tpu.dot_dimension_numbers<[1], [0], [0], [1], [0, 0, 1, 1], [], []>} : vector<128x32xbf16>, vector<32x16xbf16>, vector<128x16xf32> -> vector<128x16xf32>
    %c0_3 = arith.constant 0 : index
    %c0_4 = arith.constant 0 : index
    %3 = vector.load %arg3[%c0_3, %c0_4] : memref<1x16xf32, #tpu.memory_space<vmem>>, vector<1x16xf32>
    %4 = vector.broadcast %3 : vector<1x16xf32> to vector<128x16xf32>
    %5 = arith.addf %2, %4 : vector<128x16xf32>
    %cst_5 = arith.constant 0.000000e+00 : f32
    %6 = vector.broadcast %cst_5 : f32 to vector<128x16xf32>
    %7 = arith.maximumf %5, %6 : vector<128x16xf32>
    %c0_6 = arith.constant 0 : index
    %c0_7 = arith.constant 0 : index
    %8 = vector.load %arg4[%c0_6, %c0_7] : memref<8x16xbf16, #tpu.memory_space<vmem>>, vector<8x16xbf16>
    %9 = arith.truncf %7 : vector<128x16xf32> to vector<128x16xbf16>
    "tpu.trace_start"() <{level = 10 : i32, message = "od,md->om"}> : () -> ()
    %cst_8 = arith.constant dense<0.000000e+00> : vector<8x128xf32>
    %10 = tpu.matmul %8, %9, %cst_8 {dimension_numbers = #tpu.dot_dimension_numbers<[1], [1], [0], [0], [0, 0, 1, 0], [], []>} : vector<8x16xbf16>, vector<128x16xbf16>, vector<8x128xf32> -> vector<8x128xf32>
    "tpu.trace_stop"() : () -> ()
    %c0_9 = arith.constant 0 : index
    %c0_10 = arith.constant 0 : index
    %11 = vector.load %arg5[%c0_9, %c0_10] : memref<8x1xf32, #tpu.memory_space<vmem>>, vector<8x1xf32>
    %12 = vector.broadcast %11 : vector<8x1xf32> to vector<8x128xf32>
    %13 = arith.addf %10, %12 : vector<8x128xf32>
    %cst_11 = arith.constant 0.000000e+00 : f32
    %14 = vector.broadcast %cst_11 : f32 to vector<8x128xf32>
    %15 = arith.maximumf %13, %14 : vector<8x128xf32>
    %c0_12 = arith.constant 0 : index
    %c0_13 = arith.constant 0 : index
    %16 = vector.load %arg6[%c0_12, %c0_13] : memref<8x1xf32, #tpu.memory_space<vmem>>, vector<8x1xf32>
    %17 = vector.broadcast %16 : vector<8x1xf32> to vector<8x128xf32>
    %18 = arith.mulf %17, %15 : vector<8x128xf32>
    %cst_14 = arith.constant dense<0.000000e+00> : vector<128xf32>
    %19 = vector.multi_reduction <add>, %18, %cst_14 [0] : vector<8x128xf32> to vector<128xf32>
    %20 = vector.shape_cast %19 : vector<128xf32> to vector<1x128xf32>
    %c0_15 = arith.constant 0 : index
    %c0_16 = arith.constant 0 : index
    %21 = vector.load %arg7[%c0_15, %c0_16] : memref<1x1xf32, #tpu.memory_space<vmem>>, vector<1x1xf32>
    %22 = vector.broadcast %21 : vector<1x1xf32> to vector<1x128xf32>
    %23 = arith.addf %20, %22 : vector<1x128xf32>
    %cst_17 = arith.constant 0.000000e+00 : f32
    %cst_18 = arith.constant 6.000000e+00 : f32
    %24 = vector.broadcast %cst_17 : f32 to vector<1x128xf32>
    %25 = arith.maximumf %24, %23 : vector<1x128xf32>
    %26 = vector.broadcast %cst_18 : f32 to vector<1x128xf32>
    %27 = arith.minimumf %26, %25 : vector<1x128xf32>
    %28 = vector.shape_cast %27 : vector<1x128xf32> to vector<1x1x128xf32>
    %c0_19 = arith.constant 0 : index
    %c0_20 = arith.constant 0 : index
    %c0_21 = arith.constant 0 : index
    %29 = vector.load %arg8[%c0_19, %c0_20, %c0_21] : memref<1x1x128xf32, #tpu.memory_space<vmem>>, vector<1x1x128xf32>
    tpu.vector_store %arg8[%c0_19, %c0_20, %c0_21], %28 {strides = array<i32>} : memref<1x1x128xf32, #tpu.memory_space<vmem>>, vector<1x1x128xf32>,
    return
  }
  func.func @transform_0(%arg0: i32) -> (i32, i32) {
    %c0_i32 = arith.constant 0 : i32
    %c0_i32_0 = arith.constant 0 : i32
    return %arg0, %c0_i32 : i32, i32
  }
  func.func @transform_1(%arg0: i32) -> (i32, i32) {
    %c0_i32 = arith.constant 0 : i32
    %c0_i32_0 = arith.constant 0 : i32
    %c0_i32_1 = arith.constant 0 : i32
    return %c0_i32, %c0_i32_0 : i32, i32
  }
  func.func @transform_2(%arg0: i32) -> (i32, i32) {
    %c0_i32 = arith.constant 0 : i32
    %c0_i32_0 = arith.constant 0 : i32
    %c0_i32_1 = arith.constant 0 : i32
    return %c0_i32, %c0_i32_0 : i32, i32
  }
  func.func @transform_3(%arg0: i32) -> (i32, i32) {
    %c0_i32 = arith.constant 0 : i32
    %c0_i32_0 = arith.constant 0 : i32
    %c0_i32_1 = arith.constant 0 : i32
    return %c0_i32, %c0_i32_0 : i32, i32
  }
  func.func @transform_4(%arg0: i32) -> (i32, i32) {
    %c0_i32 = arith.constant 0 : i32
    %c0_i32_0 = arith.constant 0 : i32
    %c0_i32_1 = arith.constant 0 : i32
    return %c0_i32, %c0_i32_0 : i32, i32
  }
  func.func @transform_5(%arg0: i32) -> (i32, i32) {
    %c0_i32 = arith.constant 0 : i32
    %c0_i32_0 = arith.constant 0 : i32
    %c0_i32_1 = arith.constant 0 : i32
    return %c0_i32, %c0_i32_0 : i32, i32
  }
  func.func @transform_6(%arg0: i32) -> (i32, i32) {
    %c0_i32 = arith.constant 0 : i32
    %c0_i32_0 = arith.constant 0 : i32
    %c0_i32_1 = arith.constant 0 : i32
    return %c0_i32, %c0_i32_0 : i32, i32
  }
  func.func @transform_7(%arg0: i32) -> (i32, i32, i32) {
    %c0_i32 = arith.constant 0 : i32
    %c0_i32_0 = arith.constant 0 : i32
    %c0_i32_1 = arith.constant 0 : i32
    return %arg0, %c0_i32, %c0_i32_0 : i32, i32, i32
  }
}

</mosaic_0001>

<llo_original>
// kernel: tpu_custom_call.1
$region0: #{tpu_custom_call.1}
  #allocation0 [shape = 'u32[]', space=smem, size = 0x4, offset = 0x4, fixed_abs, tag = 'smem constant byte address 0x4 - core index']
  #allocation1 [shape = 'u32[144,128]{1,0:T(1,128)}', space=vmem, size = 0x12000, scoped, tag = 'internal scratch']
  #allocation2 [shape = 'f32[1,1]{1,0:T(1,128)S(1)}', space=vmem, size = 0x200, scoped, tag = 'scoped memory for tpu_custom_call.1']
  %s0 = inlined_call_operand.vmem [shape: bf16[512,32], index: 0, kind: input, shape index: {}]
  %s1 = inlined_call_operand.vmem [shape: bf16[32,16], index: 1, kind: input, shape index: {}]
  %s2 = inlined_call_operand.vmem [shape: f32[1,16], index: 2, kind: input, shape index: {}]
  %s3 = inlined_call_operand.vmem [shape: bf16[8,16], index: 3, kind: input, shape index: {}]
  %s4 = inlined_call_operand.vmem [shape: f32[8,1], index: 4, kind: input, shape index: {}]
  %s5 = inlined_call_operand.vmem [shape: f32[8,1], index: 5, kind: input, shape index: {}]
  %s6 = inlined_call_operand.<no memory space> [shape: f32[1,1], index: 6, kind: input, shape index: {}]
  %s7 = inlined_call_operand.hbm [shape: f32[4,1,128], index: 7, kind: output, shape index: {}]
  %s8 = sld [smem:[#allocation0]]
  $region61: #{tpu_custom_call.1} parent=0
    _
  %s10 = ssub.s32 1, %s8
  %s11 = scalar_select 0, %s10, %s8
  %v12 = vstv %s6
  %13 = vst [vmem:[#allocation2] sm:$0x1] %v12
  $region1: #{tpu_custom_call.1} parent=0
    #allocation3 [shape = 'u8[1024]{0}', space=vmem, size = 0x400, scoped, tag = 'output window, operand 0']
    #allocation4 [shape = 's32[2]{0}', space=sflag, size = 0x8, scoped, tag = 'scoped memory for tpu_custom_call.1']
    %14 = vsyncpa [#allocation4], 0
    %s15 = scalar_lea.sflag [#allocation4], 1
    %16 = vsyncpa %s15, 0
    loop: start=0, step=1, limit=6
    $region2: #{tpu_custom_call.1} parent=1 // loop_pre_header
      _
    $region3: #{tpu_custom_call.1} parent=1 // loop_header
      %s18 = sphi 0, %s22
      %p19 = scmp.ge.s32.totalorder %s18, 6
      %s28 = sphi 0, %s30
      %s31 = sphi 0, %s28
      %s32 = sphi 0, %s31
      %s48 = sphi 0, %s32
      %s52 = sphi 0, %s52
      %s54 = sphi 0, %s52
      %s55 = sphi 0, %s54
      %s69 = sphi 0, %s55
      %s73 = sphi 0, %s73
      %s75 = sphi 0, %s73
      %s76 = sphi 0, %s75
      %s90 = sphi 0, %s76
      %s94 = sphi 0, %s94
      %s96 = sphi 0, %s94
      %s97 = sphi 0, %s96
      %s111 = sphi 0, %s97
      %s115 = sphi 0, %s115
      %s117 = sphi 0, %s115
      %s118 = sphi 0, %s117
      %s132 = sphi 0, %s118
      %s136 = sphi 0, %s136
      %s138 = sphi 0, %s136
      %s139 = sphi 0, %s138
      %s153 = sphi 0, %s139
      %s157 = sphi 0, %s157
      %s159 = sphi 0, %s157
      %s160 = sphi 0, %s159
      %s174 = sphi 0, %s160
      %s180 = sphi 0, %s182
      %s183 = sphi 0, %s180
      %s184 = sphi 0, %s183
      %s200 = sphi 0, %s184
    $region4: #{tpu_custom_call.1} parent=1 // loop_header_branch
      %21 = sbr.rel (%p19) target = $region8
    $region5: #{tpu_custom_call.1} parent=1 // loop_body
      %s23 = ssub.s32 %s18, 1
      %s24 = ssub.s32 %s18, 2
      %s25 = sadd.s32 %s18, 1
      %s26 = ssub.s32 %s18, %s25
      %p27 = scmp.eq.s32.totalorder %s26, 0
      %s29 = sadd.s32 %s28, 1
      %s30 = scalar_select %p27, %s28, %s29
      %p33 = pneg %p27
      %p34 = scmp.eq.s32.totalorder %s18, 3
      %p35 = por %p33, %p34
      %p36 = scmp.ne.s32.totalorder %s28, %s31
      %p37 = scmp.eq.s32.totalorder %s18, 0
      %p38 = por %p36, %p37
      %p39 = scmp.ne.s32.totalorder %s28, %s31
      %p40 = scmp.eq.s32.totalorder %s23, 3
      %p41 = por %p39, %p40
      %p42 = scmp.ne.s32.totalorder %s31, %s32
      %p43 = scmp.eq.s32.totalorder %s23, 0
      %p44 = por %p42, %p43
      %p45 = scmp.ne.s32.totalorder %s31, %s32
      %p46 = scmp.eq.s32.totalorder %s24, 3
      %p47 = por %p45, %p46
      %p49 = scmp.ne.s32.totalorder %s32, %s48
      %p50 = scmp.eq.s32.totalorder %s24, 0
      %p51 = por %p49, %p50
      %s53 = sadd.s32 %s52, 1
      %p56 = scmp.eq.s32.totalorder %s18, 3
      %p57 = scmp.ne.s32.totalorder %s52, %s54
      %p58 = scmp.eq.s32.totalorder %s18, 0
      %p59 = por %p57, %p58
      %p60 = scmp.ne.s32.totalorder %s52, %s54
      %p61 = scmp.eq.s32.totalorder %s23, 3
      %p62 = por %p60, %p61
      %p63 = scmp.ne.s32.totalorder %s54, %s55
      %p64 = scmp.eq.s32.totalorder %s23, 0
      %p65 = por %p63, %p64
      %p66 = scmp.ne.s32.totalorder %s54, %s55
      %p67 = scmp.eq.s32.totalorder %s24, 3
      %p68 = por %p66, %p67
      %p70 = scmp.ne.s32.totalorder %s55, %s69
      %p71 = scmp.eq.s32.totalorder %s24, 0
      %p72 = por %p70, %p71
      %s74 = sadd.s32 %s73, 1
      %p77 = scmp.eq.s32.totalorder %s18, 3
      %p78 = scmp.ne.s32.totalorder %s73, %s75
      %p79 = scmp.eq.s32.totalorder %s18, 0
      %p80 = por %p78, %p79
      %p81 = scmp.ne.s32.totalorder %s73, %s75
      %p82 = scmp.eq.s32.totalorder %s23, 3
      %p83 = por %p81, %p82
      %p84 = scmp.ne.s32.totalorder %s75, %s76
      %p85 = scmp.eq.s32.totalorder %s23, 0
      %p86 = por %p84, %p85
      %p87 = scmp.ne.s32.totalorder %s75, %s76
      %p88 = scmp.eq.s32.totalorder %s24, 3
      %p89 = por %p87, %p88
      %p91 = scmp.ne.s32.totalorder %s76, %s90
      %p92 = scmp.eq.s32.totalorder %s24, 0
      %p93 = por %p91, %p92
      %s95 = sadd.s32 %s94, 1
      %p98 = scmp.eq.s32.totalorder %s18, 3
      %p99 = scmp.ne.s32.totalorder %s94, %s96
      %p100 = scmp.eq.s32.totalorder %s18, 0
      %p101 = por %p99, %p100
      %p102 = scmp.ne.s32.totalorder %s94, %s96
      %p103 = scmp.eq.s32.totalorder %s23, 3
      %p104 = por %p102, %p103
      %p105 = scmp.ne.s32.totalorder %s96, %s97
      %p106 = scmp.eq.s32.totalorder %s23, 0
      %p107 = por %p105, %p106
      %p108 = scmp.ne.s32.totalorder %s96, %s97
      %p109 = scmp.eq.s32.totalorder %s24, 3
      %p110 = por %p108, %p109
      %p112 = scmp.ne.s32.totalorder %s97, %s111
      %p113 = scmp.eq.s32.totalorder %s24, 0
      %p114 = por %p112, %p113
      %s116 = sadd.s32 %s115, 1
      %p119 = scmp.eq.s32.totalorder %s18, 3
      %p120 = scmp.ne.s32.totalorder %s115, %s117
      %p121 = scmp.eq.s32.totalorder %s18, 0
      %p122 = por %p120, %p121
      %p123 = scmp.ne.s32.totalorder %s115, %s117
      %p124 = scmp.eq.s32.totalorder %s23, 3
      %p125 = por %p123, %p124
      %p126 = scmp.ne.s32.totalorder %s117, %s118
      %p127 = scmp.eq.s32.totalorder %s23, 0
      %p128 = por %p126, %p127
      %p129 = scmp.ne.s32.totalorder %s117, %s118
      %p130 = scmp.eq.s32.totalorder %s24, 3
      %p131 = por %p129, %p130
      %p133 = scmp.ne.s32.totalorder %s118, %s132
      %p134 = scmp.eq.s32.totalorder %s24, 0
      %p135 = por %p133, %p134
      %s137 = sadd.s32 %s136, 1
      %p140 = scmp.eq.s32.totalorder %s18, 3
      %p141 = scmp.ne.s32.totalorder %s136, %s138
      %p142 = scmp.eq.s32.totalorder %s18, 0
      %p143 = por %p141, %p142
      %p144 = scmp.ne.s32.totalorder %s136, %s138
      %p145 = scmp.eq.s32.totalorder %s23, 3
      %p146 = por %p144, %p145
      %p147 = scmp.ne.s32.totalorder %s138, %s139
      %p148 = scmp.eq.s32.totalorder %s23, 0
      %p149 = por %p147, %p148
      %p150 = scmp.ne.s32.totalorder %s138, %s139
      %p151 = scmp.eq.s32.totalorder %s24, 3
      %p152 = por %p150, %p151
      %p154 = scmp.ne.s32.totalorder %s139, %s153
      %p155 = scmp.eq.s32.totalorder %s24, 0
      %p156 = por %p154, %p155
      %s158 = sadd.s32 %s157, 1
      %p161 = scmp.eq.s32.totalorder %s18, 3
      %p162 = scmp.ne.s32.totalorder %s157, %s159
      %p163 = scmp.eq.s32.totalorder %s18, 0
      %p164 = por %p162, %p163
      %p165 = scmp.ne.s32.totalorder %s157, %s159
      %p166 = scmp.eq.s32.totalorder %s23, 3
      %p167 = por %p165, %p166
      %p168 = scmp.ne.s32.totalorder %s159, %s160
      %p169 = scmp.eq.s32.totalorder %s23, 0
      %p170 = por %p168, %p169
      %p171 = scmp.ne.s32.totalorder %s159, %s160
      %p172 = scmp.eq.s32.totalorder %s24, 3
      %p173 = por %p171, %p172
      %p175 = scmp.ne.s32.totalorder %s160, %s174
      %p176 = scmp.eq.s32.totalorder %s24, 0
      %p177 = por %p175, %p176
      %s178 = ssub.s32 %s18, %s25
      %p179 = scmp.eq.s32.totalorder %s178, 0
      %s181 = sadd.s32 %s180, 1
      %s182 = scalar_select %p179, %s180, %s181
      %p185 = pneg %p179
      %p186 = scmp.eq.s32.totalorder %s18, 3
      %p187 = por %p185, %p186
      %p188 = scmp.ne.s32.totalorder %s180, %s183
      %p189 = scmp.eq.s32.totalorder %s18, 0
      %p190 = por %p188, %p189
      %p191 = scmp.ne.s32.totalorder %s180, %s183
      %p192 = scmp.eq.s32.totalorder %s23, 3
      %p193 = por %p191, %p192
      %p194 = scmp.ne.s32.totalorder %s183, %s184
      %p195 = scmp.eq.s32.totalorder %s23, 0
      %p196 = por %p194, %p195
      %p197 = scmp.ne.s32.totalorder %s183, %s184
      %p198 = scmp.eq.s32.totalorder %s24, 3
      %p199 = por %p197, %p198
      %p201 = scmp.ne.s32.totalorder %s184, %s200
      %p202 = scmp.eq.s32.totalorder %s24, 0
      %p203 = por %p201, %p202
      %p204 = scmp.le.s32.totalorder 1, %s18
      %p205 = scmp.lt.s32.totalorder %s18, 5
      %p206 = pnand %p204, %p205
      %p207 = pneg %p206
      // Predicated region
      $region9: #{tpu_custom_call.1} parent=5 // pred_check
        _
      $region10: #{tpu_custom_call.1} parent=5 // pred_check_branch
        %209 = sbr.rel (%p206) target = $region12
      $region11: #{tpu_custom_call.1} parent=5 // pred_region
        %s210 = ssub.s32 %s18, 1
        // Predicated region
        $region13: #{tpu_custom_call.1} parent=11 // pred_check
          %p211 = pneg %p65
        $region14: #{tpu_custom_call.1} parent=11 // pred_check_branch
          %213 = sbr.rel (%p211) target = $region16
        $region15: #{tpu_custom_call.1} parent=11 // pred_region
          _
        $region16: #{tpu_custom_call.1} parent=11 // pred_fallthru
          _
        // Predicated region
        $region17: #{tpu_custom_call.1} parent=11 // pred_check
          %p214 = pneg %p86
        $region18: #{tpu_custom_call.1} parent=11 // pred_check_branch
          %216 = sbr.rel (%p214) target = $region20
        $region19: #{tpu_custom_call.1} parent=11 // pred_region
          _
        $region20: #{tpu_custom_call.1} parent=11 // pred_fallthru
          _
        // Predicated region
        $region21: #{tpu_custom_call.1} parent=11 // pred_check
          %p217 = pneg %p107
        $region22: #{tpu_custom_call.1} parent=11 // pred_check_branch
          %219 = sbr.rel (%p217) target = $region24
        $region23: #{tpu_custom_call.1} parent=11 // pred_region
          _
        $region24: #{tpu_custom_call.1} parent=11 // pred_fallthru
          _
        // Predicated region
        $region25: #{tpu_custom_call.1} parent=11 // pred_check
          %p220 = pneg %p128
        $region26: #{tpu_custom_call.1} parent=11 // pred_check_branch
          %222 = sbr.rel (%p220) target = $region28
        $region27: #{tpu_custom_call.1} parent=11 // pred_region
          _
        $region28: #{tpu_custom_call.1} parent=11 // pred_fallthru
          _
        // Predicated region
        $region29: #{tpu_custom_call.1} parent=11 // pred_check
          %p223 = pneg %p149
        $region30: #{tpu_custom_call.1} parent=11 // pred_check_branch
          %225 = sbr.rel (%p223) target = $region32
        $region31: #{tpu_custom_call.1} parent=11 // pred_region
          _
        $region32: #{tpu_custom_call.1} parent=11 // pred_fallthru
          _
        // Predicated region
        $region33: #{tpu_custom_call.1} parent=11 // pred_check
          %p226 = pneg %p170
        $region34: #{tpu_custom_call.1} parent=11 // pred_check_branch
          %228 = sbr.rel (%p226) target = $region36
        $region35: #{tpu_custom_call.1} parent=11 // pred_region
          _
        $region36: #{tpu_custom_call.1} parent=11 // pred_fallthru
          _
      $region12: #{tpu_custom_call.1} parent=5 // pred_fallthru
        _
      %p229 = scmp.lt.s32.totalorder %s18, 4
      // Predicated region
      $region37: #{tpu_custom_call.1} parent=5 // pred_check
        %p230 = pneg %p229
      $region38: #{tpu_custom_call.1} parent=5 // pred_check_branch
        %232 = sbr.rel (%p230) target = $region40
      $region39: #{tpu_custom_call.1} parent=5 // pred_region
        // Predicated region
        $region41: #{tpu_custom_call.1} parent=39 // pred_check
          %p233 = pneg %p38
        $region42: #{tpu_custom_call.1} parent=39 // pred_check_branch
          %235 = sbr.rel (%p233) target = $region44
        $region43: #{tpu_custom_call.1} parent=39 // pred_region
          %s236 = smul.u32 16, %s18
          %p237 = scmp.lt.s32.totalorder %s236, 63
          %s238 = scalar_select %p237, %s236, 63
          %s239 = smul.addr %s238, 4
          %s240 = scalar_lea.vmem %s0, %s239
          %s241 = smul.u32 16, %s18
        $region44: #{tpu_custom_call.1} parent=39 // pred_fallthru
          _
      $region40: #{tpu_custom_call.1} parent=5 // pred_fallthru
        _
      %p242 = scmp.le.s32.totalorder 1, %s18
      %p243 = scmp.lt.s32.totalorder %s18, 5
      %p244 = pnand %p242, %p243
      %p245 = pneg %p244
      // Predicated region
      $region45: #{tpu_custom_call.1} parent=5 // pred_check
        _
      $region46: #{tpu_custom_call.1} parent=5 // pred_check_branch
        %247 = sbr.rel (%p244) target = $region48
      $region47: #{tpu_custom_call.1} parent=5 // pred_region
        %s248 = ssub.s32 %s18, 1
        %s249 = smul.u32 16, %s23
        %p250 = scmp.lt.s32.totalorder %s249, 63
        %s251 = scalar_select %p250, %s249, 63
        %s252 = smul.addr %s251, 4
        %s253 = scalar_lea.vmem %s0, %s252
        %p254 = pneg %p44
        %p255 = pneg %p41
        %p256 = pneg %p65
        %p257 = pneg %p62
        %p258 = pneg %p86
        %p259 = pneg %p83
        %p260 = pneg %p107
        %p261 = pneg %p104
        %p262 = pneg %p128
        %p263 = pneg %p125
        %p264 = pneg %p149
        %p265 = pneg %p146
        %p266 = pneg %p170
        %p267 = pneg %p167
        %p268 = pneg %p196
        %p269 = pneg %p193
        %s270 = sand.u32 %s183, 1
        %s271 = scalar_lea.sflag [#allocation4], %s270
        %s272 = sand.u32 %s183, 1
        %s273 = scalar_lea.vmem [#allocation3], %s272
        %s274 = smul.u32 16, %s23
        %p275 = scmp.lt.s32.totalorder %s274, 63
        %s276 = scalar_select %p275, %s274, 63
        %s277 = smul.addr %s276, 4
        %s278 = scalar_lea.vmem %s0, %s277
        %s279 = smul.u32 16, %s23
        %v281 = vld [vmem:[%s278] sm:$0xf]
        %v282 = vld [vmem:[%s278 + $0x4] sm:$0xf]
        %v283 = vld [vmem:[%s278 + $0x8] sm:$0xf]
        %v284 = vld [vmem:[%s278 + $0xc] sm:$0xf]
        %v285 = vld [vmem:[%s278 + $0x10] sm:$0xf]
        %v286 = vld [vmem:[%s278 + $0x14] sm:$0xf]
        %v287 = vld [vmem:[%s278 + $0x18] sm:$0xf]
        %v288 = vld [vmem:[%s278 + $0x1c] sm:$0xf]
        %v289 = vld [vmem:[%s278 + $0x20] sm:$0xf]
        %v290 = vld [vmem:[%s278 + $0x24] sm:$0xf]
        %v291 = vld [vmem:[%s278 + $0x28] sm:$0xf]
        %v292 = vld [vmem:[%s278 + $0x2c] sm:$0xf]
        %v293 = vld [vmem:[%s278 + $0x30] sm:$0xf]
        %v294 = vld [vmem:[%s278 + $0x34] sm:$0xf]
        %v295 = vld [vmem:[%s278 + $0x38] sm:$0xf]
        %v296 = vld [vmem:[%s278 + $0x3c] sm:$0xf]
        %v297 = vld [vmem:[%s1] sm:$0xf]
        %v298 = vld [vmem:[%s1 + $0x4] sm:$0xf]
        %v299 = vld [vmem:[%s1 + $0x8] sm:$0xf]
        %v300 = vld [vmem:[%s1 + $0xc] sm:$0xf]
        %v301 = vld [vmem:[%s2] sm:$0x1]
        %v303 = vlaneseq
        %v304 = vshrl.u32 %v303, 7
        %v305 = vsub.s32 0, %v304
        %v306 = vrot.slane %v301, %v305
        %v324 = vunpack.c.l.b16 %v281
        %v325 = vunpack.c.l.b16 %v282
        %v326 = vunpack.c.l.b16 %v283
        %v327 = vunpack.c.l.b16 %v284
        %v328 = vunpack.c.l.b16 %v285
        %v329 = vunpack.c.l.b16 %v286
        %v330 = vunpack.c.l.b16 %v287
        %v331 = vunpack.c.l.b16 %v288
        %v332 = vunpack.c.l.b16 %v289
        %v333 = vunpack.c.l.b16 %v290
        %v334 = vunpack.c.l.b16 %v291
        %v335 = vunpack.c.l.b16 %v292
        %v336 = vunpack.c.l.b16 %v293
        %v337 = vunpack.c.l.b16 %v294
        %v338 = vunpack.c.l.b16 %v295
        %v339 = vunpack.c.l.b16 %v296
        %v340 = vpack.c.b16 %v325, %v324
        %v341 = vpack.c.b16 %v327, %v326
        %v342 = vpack.c.b16 %v329, %v328
        %v343 = vpack.c.b16 %v331, %v330
        %v344 = vpack.c.b16 %v333, %v332
        %v345 = vpack.c.b16 %v335, %v334
        %v346 = vpack.c.b16 %v337, %v336
        %v347 = vpack.c.b16 %v339, %v338
        %v352 = vunpack.c.l.b16 %v297
        %v353 = vunpack.c.l.b16 %v298
        %v354 = vunpack.c.l.b16 %v299
        %v355 = vunpack.c.l.b16 %v300
        %v356 = vpack.c.b16 %v353, %v352
        %v357 = vpack.c.b16 %v355, %v354
        %vm360 = vcmask 261120
        %v362 = vsel %vm360, %v340, 0
        %v365 = vsel %vm360, %v341, 0
        %v368 = vsel %vm360, %v342, 0
        %v371 = vsel %vm360, %v343, 0
        %v374 = vsel %vm360, %v344, 0
        %v377 = vsel %vm360, %v345, 0
        %v380 = vsel %vm360, %v346, 0
        %v383 = vsel %vm360, %v347, 0
        %385 = vmatprep.subr.bf16.mxu0 0
        %386 = vmatpush1.bf16.msra.mxu0 0
        %387 = vmatprep.subr.bf16.mxu0 0
        %388 = vmatpush1.bf16.msra.mxu0 0
        %389 = vmatprep.subr.bf16.mxu0 0
        %390 = vmatpush1.bf16.msra.mxu0 0
        %391 = vmatprep.subr.bf16.mxu0 0
        %392 = vmatpush1.bf16.msra.mxu0 0
        %393 = vmatprep.subr.bf16.mxu0 0
        %394 = vmatpush1.bf16.msra.mxu0 0
        %395 = vmatprep.subr.bf16.mxu0 0
        %396 = vmatpush1.bf16.msra.mxu0 0
        %397 = vmatprep.subr.bf16.mxu0 0
        %398 = vmatpush1.bf16.msra.mxu0 %v357
        %399 = vmatprep.subr.bf16.mxu0 0
        %400 = vmatpush1.bf16.msra.mxu0 %v356
        %401 = vmatprep.subr.bf16.mxu0 0
        %402 = vmatpush2.bf16.msra.mxu0 0
        %403 = vmatprep.subr.bf16.mxu0 0
        %404 = vmatpush2.bf16.msra.mxu0 0
        %405 = vmatprep.subr.bf16.mxu0 0
        %406 = vmatpush2.bf16.msra.mxu0 0
        %407 = vmatprep.subr.bf16.mxu0 0
        %408 = vmatpush2.bf16.msra.mxu0 0
        %409 = vmatprep.subr.bf16.mxu0 0
        %410 = vmatpush2.bf16.msra.mxu0 0
        %411 = vmatprep.subr.bf16.mxu0 0
        %412 = vmatpush2.bf16.msra.mxu0 0
        %413 = vmatprep.subr.bf16.mxu0 0
        %414 = vmatpush2.bf16.msra.mxu0 0
        %415 = vmatprep.subr.bf16.mxu0 0
        %416 = vmatpush2.bf16.msra.mxu0 0
        %417 = vmatprep.mubr.bf16.mxu0 0
        %418 = vmatmul.mubr.bf16.gmra.mxu0 %v362
        %v419 = vpop.f32.mrf.mxu0
        %v420 = vadd.f32 %v306, %v419
        %v421 = vpop.f32.mrf.mxu0
        %v422 = vpop.f32.mrf.mxu0
        %v423 = vadd.f32 %v306, %v422
        %v424 = vpop.f32.mrf.mxu0
        %425 = vmatprep.mubr.bf16.mxu0 0
        %426 = vmatmul.mubr.bf16.gmra.mxu0 %v365
        %v427 = vpop.f32.mrf.mxu0
        %v428 = vadd.f32 %v306, %v427
        %v429 = vpop.f32.mrf.mxu0
        %v430 = vpop.f32.mrf.mxu0
        %v431 = vadd.f32 %v306, %v430
        %v432 = vpop.f32.mrf.mxu0
        %433 = vmatprep.mubr.bf16.mxu0 0
        %434 = vmatmul.mubr.bf16.gmra.mxu0 %v368
        %v435 = vpop.f32.mrf.mxu0
        %v436 = vadd.f32 %v306, %v435
        %v437 = vpop.f32.mrf.mxu0
        %v438 = vpop.f32.mrf.mxu0
        %v439 = vadd.f32 %v306, %v438
        %v440 = vpop.f32.mrf.mxu0
        %441 = vmatprep.mubr.bf16.mxu0 0
        %442 = vmatmul.mubr.bf16.gmra.mxu0 %v371
        %v443 = vpop.f32.mrf.mxu0
        %v444 = vadd.f32 %v306, %v443
        %v445 = vpop.f32.mrf.mxu0
        %v446 = vpop.f32.mrf.mxu0
        %v447 = vadd.f32 %v306, %v446
        %v448 = vpop.f32.mrf.mxu0
        %449 = vmatprep.mubr.bf16.mxu0 0
        %450 = vmatmul.mubr.bf16.gmra.mxu0 %v374
        %v451 = vpop.f32.mrf.mxu0
        %v452 = vadd.f32 %v306, %v451
        %v453 = vpop.f32.mrf.mxu0
        %v454 = vpop.f32.mrf.mxu0
        %v455 = vadd.f32 %v306, %v454
        %v456 = vpop.f32.mrf.mxu0
        %457 = vmatprep.mubr.bf16.mxu0 0
        %458 = vmatmul.mubr.bf16.gmra.mxu0 %v377
        %v459 = vpop.f32.mrf.mxu0
        %v460 = vadd.f32 %v306, %v459
        %v461 = vpop.f32.mrf.mxu0
        %v462 = vpop.f32.mrf.mxu0
        %v463 = vadd.f32 %v306, %v462
        %v464 = vpop.f32.mrf.mxu0
        %465 = vmatprep.mubr.bf16.mxu0 0
        %466 = vmatmul.mubr.bf16.gmra.mxu0 %v380
        %v467 = vpop.f32.mrf.mxu0
        %v468 = vadd.f32 %v306, %v467
        %v469 = vpop.f32.mrf.mxu0
        %v470 = vpop.f32.mrf.mxu0
        %v471 = vadd.f32 %v306, %v470
        %v472 = vpop.f32.mrf.mxu0
        %473 = vmatprep.mubr.bf16.mxu0 0
        %474 = vmatmul.mubr.bf16.gmra.mxu0 %v383
        %v475 = vpop.f32.mrf.mxu0
        %v476 = vadd.f32 %v306, %v475
        %v477 = vpop.f32.mrf.mxu0
        %v478 = vpop.f32.mrf.mxu0
        %v479 = vadd.f32 %v306, %v478
        %v480 = vpop.f32.mrf.mxu0
        %481 = vdwg.mxu0
        %v482 = vmax.f32 %v420, 0.0
        %v483 = vmax.f32 %v423, 0.0
        %v484 = vmax.f32 %v428, 0.0
        %v485 = vmax.f32 %v431, 0.0
        %v486 = vmax.f32 %v436, 0.0
        %v487 = vmax.f32 %v439, 0.0
        %v488 = vmax.f32 %v444, 0.0
        %v489 = vmax.f32 %v447, 0.0
        %v490 = vmax.f32 %v452, 0.0
        %v491 = vmax.f32 %v455, 0.0
        %v492 = vmax.f32 %v460, 0.0
        %v493 = vmax.f32 %v463, 0.0
        %v494 = vmax.f32 %v468, 0.0
        %v495 = vmax.f32 %v471, 0.0
        %v496 = vmax.f32 %v476, 0.0
        %v497 = vmax.f32 %v479, 0.0
        %v498 = vld [vmem:[%s3] sm:$0xf]
        %v499 = vpack.c.bf16 %v483, %v482
        %v500 = vpack.c.bf16 %v485, %v484
        %v501 = vpack.c.bf16 %v487, %v486
        %v502 = vpack.c.bf16 %v489, %v488
        %v503 = vpack.c.bf16 %v491, %v490
        %v504 = vpack.c.bf16 %v493, %v492
        %v505 = vpack.c.bf16 %v495, %v494
        %v506 = vpack.c.bf16 %v497, %v496
        %v507 = vld [vmem:[%s4] sm:$0xff]
        %509 = vset.pattern.permute.xlu0 0
        %510 = vperm.xlu0 %509, %v507
        %v511 = vpop.permute.xlu0 %510
        %vm513 = vcmask 130048
        %v515 = vsel %vm513, %v498, 0
        %v518 = vsel %vm513, %v499, 0
        %v521 = vsel %vm513, %v500, 0
        %v524 = vsel %vm513, %v501, 0
        %v527 = vsel %vm513, %v502, 0
        %v530 = vsel %vm513, %v503, 0
        %v533 = vsel %vm513, %v504, 0
        %v536 = vsel %vm513, %v505, 0
        %v539 = vsel %vm513, %v506, 0
        %541 = vmatprep.subr.bf16.mxu0 0
        %542 = vmatpush1.bf16.xpose.msra.mxu0 %v539
        %543 = vmatprep.subr.bf16.mxu0 0
        %544 = vmatpush1.bf16.xpose.msra.mxu0 %v536
        %545 = vmatprep.subr.bf16.mxu0 0
        %546 = vmatpush1.bf16.xpose.msra.mxu0 %v533
        %547 = vmatprep.subr.bf16.mxu0 0
        %548 = vmatpush1.bf16.xpose.msra.mxu0 %v530
        %549 = vmatprep.subr.bf16.mxu0 0
        %550 = vmatpush1.bf16.xpose.msra.mxu0 %v527
        %551 = vmatprep.subr.bf16.mxu0 0
        %552 = vmatpush1.bf16.xpose.msra.mxu0 %v524
        %553 = vmatprep.subr.bf16.mxu0 0
        %554 = vmatpush1.bf16.xpose.msra.mxu0 %v521
        %555 = vmatprep.subr.bf16.mxu0 0
        %556 = vmatpush1.bf16.xpose.msra.mxu0 %v518
        %557 = vmatprep.subr.bf16.mxu0 0
        %558 = vmatpush2.bf16.xpose.msra.mxu0 0
        %559 = vmatprep.subr.bf16.mxu0 0
        %560 = vmatpush2.bf16.xpose.msra.mxu0 0
        %561 = vmatprep.subr.bf16.mxu0 0
        %562 = vmatpush2.bf16.xpose.msra.mxu0 0
        %563 = vmatprep.subr.bf16.mxu0 0
        %564 = vmatpush2.bf16.xpose.msra.mxu0 0
        %565 = vmatprep.subr.bf16.mxu0 0
        %566 = vmatpush2.bf16.xpose.msra.mxu0 0
        %567 = vmatprep.subr.bf16.mxu0 0
        %568 = vmatpush2.bf16.xpose.msra.mxu0 0
        %569 = vmatprep.subr.bf16.mxu0 0
        %570 = vmatpush2.bf16.xpose.msra.mxu0 0
        %571 = vmatprep.subr.bf16.mxu0 0
        %572 = vmatpush2.bf16.xpose.msra.mxu0 0
        %573 = vmatprep.mubr.bf16.mxu0 0
        %574 = vmatmul.mubr.bf16.gmra.mxu0 %v515
        %v575 = vpop.f32.mrf.mxu0
        %v576 = vadd.f32 %v511, %v575
        %v577 = vpop.f32.mrf.mxu0
        %v578 = vpop.f32.mrf.mxu0
        %v579 = vpop.f32.mrf.mxu0
        %580 = vdwg.mxu0
        %v581 = vmax.f32 %v576, 0.0
        %v582 = vld [vmem:[%s5] sm:$0xff]
        %584 = vset.pattern.permute.xlu0 0
        %585 = vperm.xlu0 %584, %v582
        %v586 = vpop.permute.xlu0 %585
        %v588 = vmul.f32 %v586, %v581
        %v589 = vrot.slane %v588, 4
        %v590 = vadd.f32 %v588, %v589
        %v591 = vrot.slane %v590, 2
        %v592 = vadd.f32 %v590, %v591
        %v593 = vrot.slane %v592, 1
        %v594 = vadd.f32 %v592, %v593
        %v595 = vld [vmem:[#allocation2] sm:$0x1]
        %597 = vset.pattern.permute.xlu0 0
        %598 = vperm.xlu0 %597, %v595
        %v599 = vpop.permute.xlu0 %598
        %v601 = vlaneseq
        %v602 = vshrl.u32 %v601, 7
        %v603 = vsub.s32 0, %v602
        %v604 = vrot.slane %v599, %v603
        %v605 = vadd.f32 %v594, %v604
        %v606 = vmax.f32 %v605, 0.0
        %v607 = vmin.f32 %v606, 6.0
        %608 = vst [vmem:[%s273] sm:$0x1] %v607
        %s609 = sand.u32 %s183, 1
        %s610 = scalar_lea.sflag [#allocation4], %s609
        %s611 = sand.u32 %s183, 1
        %s612 = scalar_lea.vmem [#allocation3], %s611
        // Predicated region
        $region49: #{tpu_custom_call.1} parent=47 // pred_check
          %p613 = pneg %p193
        $region50: #{tpu_custom_call.1} parent=47 // pred_check_branch
          %615 = sbr.rel (%p613) target = $region52
        $region51: #{tpu_custom_call.1} parent=47 // pred_region
          %s617 = ssub.s32 16, 16
          %618 = vsyncadd %s610, %s617
          %s619 = smul.addr %s23, 16
          %s620 = scalar_lea.hbm %s7, %s619
          %s622 = sshll.u32 %s612, 4
          %s623 = int_to_ptr.vmem [resolvable:$true] %s622
          %625 = dma.vmem_to_hbm [thread:$0]  %s623, 16, %s620, %s610
        $region52: #{tpu_custom_call.1} parent=47 // pred_fallthru
          _
      $region48: #{tpu_custom_call.1} parent=5 // pred_fallthru
        _
      %p626 = scmp.le.s32.totalorder 2, %s18
      // Predicated region
      $region53: #{tpu_custom_call.1} parent=5 // pred_check
        %p627 = pneg %p626
      $region54: #{tpu_custom_call.1} parent=5 // pred_check_branch
        %629 = sbr.rel (%p627) target = $region56
      $region55: #{tpu_custom_call.1} parent=5 // pred_region
        %s630 = ssub.s32 %s18, 2
        // Predicated region
        $region57: #{tpu_custom_call.1} parent=55 // pred_check
          %p631 = pneg %p199
        $region58: #{tpu_custom_call.1} parent=55 // pred_check_branch
          %633 = sbr.rel (%p631) target = $region60
        $region59: #{tpu_custom_call.1} parent=55 // pred_region
          %s634 = sand.u32 %s184, 1
          %s635 = scalar_lea.sflag [#allocation4], %s634
          %s636 = sand.u32 %s184, 1
          %s637 = scalar_lea.vmem [#allocation3], %s636
          %638 = dma.done %s635, 16
        $region60: #{tpu_custom_call.1} parent=55 // pred_fallthru
          _
      $region56: #{tpu_custom_call.1} parent=5 // pred_fallthru
        _
    $region6: #{tpu_custom_call.1} parent=1 // loop_footer
      %s22 = sadd.s32 1, %s18
    $region7: #{tpu_custom_call.1} parent=1 // loop_footer_branch
      %17 = sbr.rel target = $region3
    $region8: #{tpu_custom_call.1} parent=1 // loop_exit
      _
    %639 = vsyncpa [#allocation4], 1
    %s640 = scalar_lea.sflag [#allocation4], 1
    %641 = vsyncpa %s640, 1

</llo_original>
